<compile_context>
chip_gen: v6e
topology: v6e:2x2x1
jax: 0.10.0
libtpu: 0.0.40
codegen_flags: <defaults>
</compile_context>

<pallas_src>
import jax
import jax.numpy as jnp
from jax.experimental import pallas as pl
from jax.experimental.pallas import tpu as pltpu

_T = 3.0
_INV_T = 1.0 / _T
_EPS = 1e-7
_MIB = 1024 * 1024


def _make_kl_kernel(tile_b: int, total_b: int, exact_log: bool):
    """Kernel over one (tile_b, C) batch tile; writes a per-block partial sum."""

    def kernel(pred_ref, label_ref, out_ref):
        # Upcast to f32 in-kernel (HBM inputs are bf16 by default); fold the /T
        # into a single multiply.
        p = pred_ref[...].astype(jnp.float32) * _INV_T
        l = label_ref[...].astype(jnp.float32) * _INV_T

        # log_softmax(pred / T) along the class axis (last axis -> lanes).
        p_shift = p - jnp.max(p, axis=-1, keepdims=True)
        log_zp = jnp.log(jnp.sum(jnp.exp(p_shift), axis=-1, keepdims=True))
        log_predict = p_shift - log_zp

        # softmax(label / T) (+ eps).  One reciprocal per row (tile_b values),
        # then a broadcast multiply across the class axis.
        l_shift = l - jnp.max(l, axis=-1, keepdims=True)
        e = jnp.exp(l_shift)
        row_sum = jnp.sum(e, axis=-1, keepdims=True)          # (tile_b, 1)
        inv_row = pl.reciprocal(row_sum, approx=False)        # exact: parity w/ ref
        target = e * inv_row + _EPS

        if exact_log:
            # Literal PyTorch formula: log AFTER the +1e-7 (one extra log/elem).
            log_target = jnp.log(target)
        else:
            # Fast path: reuse shifted logits -> log_softmax(label/T).  Drops
            # the +1e-7 inside the log; absolute error bounded by ~T*T*C*eps.
            log_target = l_shift - jnp.log(row_sum)

        # KL contribution per element, reduced over classes per row.
        kl = target * (log_target - log_predict)
        kl_row = jnp.sum(kl, axis=-1, keepdims=True)          # (tile_b, 1)

        # Mask rows beyond the true batch size (ragged last tile) BEFORE the
        # per-block sum; padded rows may hold garbage logits, and select()
        # keeps any NaN/Inf from leaking.
        row_ids = (pl.program_id(0) * tile_b
                   + jax.lax.broadcasted_iota(jnp.int32, (tile_b, 1), 0))
        kl_row = jnp.where(row_ids < total_b, kl_row, 0.0)

        # One scalar per block, written into lane 0 of a full-lane (1, 1, 128)
        # tile (unmasked vst).  Remaining lanes are zero, so the wrapper can do
        # a dense jnp.sum over all partials with no strided gather.
        partial = jnp.sum(kl_row)
        lane = jax.lax.broadcasted_iota(jnp.int32, (1, 1, 128), 2)
        out_ref[...] = jnp.where(lane == 0, partial, 0.0)

    return kernel


def _scoped_vmem_limit() -> int:
    """Generation-aware scoped-VMEM limit (bytes)."""
    try:
        phys = int(getattr(pltpu.get_tpu_info(), "vmem_capacity_bytes", 0)) or 64 * _MIB
    except Exception:  # pragma: no cover - conservative fallback off-TPU
        phys = 64 * _MIB                      # assume v7x per-TC VMEM
    # v5e/v6e (128 MiB physical) -> 96 MiB scoped; v7x (64 MiB) -> 48 MiB.
    return min((phys * 3) // 4, 96 * _MIB)


def _pick_tile_b(batch: int, classes: int, itemsize: int,
                 vmem_budget_bytes: int) -> int:
    # Per batch-row VMEM footprint:
    #   2 inputs x 2 pipeline buffers x C x itemsize   (double-buffered HBM tiles)
    # + ~6 full-width f32 temporaries x C x 4          (in-kernel math)
    bytes_per_row = classes * (4 * itemsize + 6 * 4)
    cap = max(int(vmem_budget_bytes) // max(bytes_per_row, 1), 8)

    align = 16 if itemsize < 4 else 8         # bf16 packs two rows per sublane
    cap = max((cap // align) * align, align)

    if batch <= align:
        return batch                           # full-dim single block is always legal

    # Prefer >= 2 blocks so the "parallel" grid axis can use both v7x TCs.
    half = (batch + 1) // 2
    two_way = -(-half // align) * align
    tile_b = min(cap, two_way)
    return max(min(tile_b, batch), align)


def kl_loss(pred, label, *, tile_b=None, exact_log=False,
            input_dtype=jnp.bfloat16):
    """pred, label: [B, C] logits. Returns scalar f32 loss.

    By default inputs are cast to bf16 before the kernel (halves HBM traffic;
    all in-kernel math is f32) and log(target) reuses log_softmax(label/T).
    Pass input_dtype=None and exact_log=True for the bit-faithful f32 path.
    """
    assert pred.shape == label.shape and pred.ndim == 2
    if input_dtype is not None:
        pred = pred.astype(input_dtype)
        label = label.astype(input_dtype)

    B, C = pred.shape
    itemsize = max(jnp.dtype(pred.dtype).itemsize, jnp.dtype(label.dtype).itemsize)
    vmem_limit = _scoped_vmem_limit()

    if tile_b is None:
        # Leave ~1/8 headroom under the scoped limit for compiler scratch.
        tile_b = _pick_tile_b(B, C, itemsize, (vmem_limit * 7) // 8)
    tile_b = min(int(tile_b), B)
    if tile_b < B:
        tile_b = max((tile_b // 8) * 8, 8)     # gridded blocks: sublane multiple of 8
    num_blocks = pl.cdiv(B, tile_b)

    # TODO(synk): vocab-scale C (>~1 MiB per f32 row) would want a 2-D grid that
    # also splits the class axis with an online logsumexp accumulator; the
    # whole-row path here is sized for classification-scale C.

    partials = pl.pallas_call(
        _make_kl_kernel(tile_b, B, exact_log),
        out_shape=jax.ShapeDtypeStruct((num_blocks, 1, 128), jnp.float32),
        grid=(num_blocks,),
        in_specs=[
            pl.BlockSpec((tile_b, C), lambda i: (i, 0)),
            pl.BlockSpec((tile_b, C), lambda i: (i, 0)),
        ],
        out_specs=pl.BlockSpec((1, 1, 128), lambda i: (i, 0, 0)),
        compiler_params=pltpu.CompilerParams(
            dimension_semantics=("parallel",),   # independent blocks -> v7x dual-TC
            vmem_limit_bytes=vmem_limit,
        ),
    )(pred, label)

    # Tiny dense final reduction (non-lane-0 entries are zero) + normalization
    # by the TRUE batch size (not the tile size).
    return (_T * _T / B) * jnp.sum(partials)


def _kl_loss_ref(pred, label):
    # Pure-JAX reference, matching the PyTorch formula exactly (f32 math).
    T = 3.0
    predict = jax.nn.log_softmax(pred.astype(jnp.float32) / T, axis=1)
    target = jax.nn.softmax(label.astype(jnp.float32) / T, axis=1) + 1e-7
    return (T * T) * jnp.sum(target * (jnp.log(target) - predict)) / pred.shape[0]


if __name__ == "__main__":
    key = jax.random.PRNGKey(0)
    k1, k2, k3, k4 = jax.random.split(key, 4)

    # Case 1: bit-faithful path (f32 inputs, exact log(softmax + eps)),
    # single-block grid (B=8, C=32).
    B, C = 8, 32
    pred = jax.random.normal(k1, (B, C), dtype=jnp.float32)
    label = jax.random.normal(k2, (B, C), dtype=jnp.float32)
    loss = jax.block_until_ready(kl_loss(pred, label, exact_log=True, input_dtype=None))
    ref = jax.block_until_ready(_kl_loss_ref(pred, label))
    assert jnp.allclose(loss, ref, rtol=1e-5, atol=1e-5), (loss, ref)

    # Case 2: default fast path (bf16 HBM inputs + log-softmax reuse), gridded
    # with a ragged last tile (B=20, tile_b=8 -> 3 blocks).  Reference uses the
    # same bf16-rounded inputs; the only modelled delta is the +1e-7 dropped
    # inside log(target), bounded by ~2*T*T*C*eps.
    B2, C2 = 20, 32
    pred2 = jax.random.normal(k3, (B2, C2), dtype=jnp.float32)
    label2 = jax.random.normal(k4, (B2, C2), dtype=jnp.float32)
    loss2 = jax.block_until_ready(kl_loss(pred2, label2, tile_b=8))
    ref2 = jax.block_until_ready(
        _kl_loss_ref(pred2.astype(jnp.bfloat16), label2.astype(jnp.bfloat16)))
    tol2 = 2.0 * _T * _T * C2 * _EPS + 1e-5
    assert jnp.allclose(loss2, ref2, rtol=1e-4, atol=tol2), (loss2, ref2)

    # Case 3: automatic byte-budgeted tiling (>= 2 blocks for dual-TC sharding),
    # default bf16 fast path (B=64, C=128 -> tile_b=32, 2 blocks).
    B3, C3 = 64, 128
    pred3 = jax.random.normal(k1, (B3, C3), dtype=jnp.float32)
    label3 = jax.random.normal(k2, (B3, C3), dtype=jnp.float32)
    loss3 = jax.block_until_ready(kl_loss(pred3, label3))
    ref3 = jax.block_until_ready(
        _kl_loss_ref(pred3.astype(jnp.bfloat16), label3.astype(jnp.bfloat16)))
    tol3 = 2.0 * _T * _T * C3 * _EPS + 1e-5
    assert jnp.allclose(loss3, ref3, rtol=1e-4, atol=tol3), (loss3, ref3)

    print("KERNEL_OK")
</pallas_src>

<mosaic_0001>
module attributes {stable_mosaic.version = 11 : i64} {
  func.func @kernel(%arg0: i32, %arg1: memref<8x32xf32, #tpu.memory_space<vmem>>, %arg2: memref<8x32xf32, #tpu.memory_space<vmem>>, %arg3: memref<1x1x128xf32, #tpu.memory_space<vmem>>) attributes {dimension_semantics = [#tpu.dimension_semantics<parallel>], iteration_bounds = array<i64: 1>, scalar_prefetch = 0 : i64, scratch_operands = 0 : i64, tpu.core_type = #tpu.core_type<tc>, window_params = [{transform_indices = @transform_0, window_bounds = array<i64: 8, 32>}, {transform_indices = @transform_1, window_bounds = array<i64: 8, 32>}, {transform_indices = @transform_2, window_bounds = array<i64: 1, 1, 128>}]} {
    %c0 = arith.constant 0 : index
    %c0_0 = arith.constant 0 : index
    %0 = vector.load %arg1[%c0, %c0_0] : memref<8x32xf32, #tpu.memory_space<vmem>>, vector<8x32xf32>
    %cst = arith.constant 0.333333343 : f32
    %1 = vector.broadcast %cst : f32 to vector<8x32xf32>
    %2 = arith.mulf %0, %1 : vector<8x32xf32>
    %c0_1 = arith.constant 0 : index
    %c0_2 = arith.constant 0 : index
    %3 = vector.load %arg2[%c0_1, %c0_2] : memref<8x32xf32, #tpu.memory_space<vmem>>, vector<8x32xf32>
    %cst_3 = arith.constant 0.333333343 : f32
    %4 = vector.broadcast %cst_3 : f32 to vector<8x32xf32>
    %5 = arith.mulf %3, %4 : vector<8x32xf32>
    %cst_4 = arith.constant dense<0xFF800000> : vector<8xf32>
    %6 = vector.multi_reduction <maximumf>, %2, %cst_4 [1] : vector<8x32xf32> to vector<8xf32>
    %7 = vector.shape_cast %6 : vector<8xf32> to vector<8x1xf32>
    %8 = vector.broadcast %7 : vector<8x1xf32> to vector<8x32xf32>
    %9 = arith.subf %2, %8 : vector<8x32xf32>
    %10 = math.exp %9 : vector<8x32xf32>
    %cst_5 = arith.constant dense<0.000000e+00> : vector<8xf32>
    %11 = vector.multi_reduction <add>, %10, %cst_5 [1] : vector<8x32xf32> to vector<8xf32>
    %12 = vector.shape_cast %11 : vector<8xf32> to vector<8x1xf32>
    %13 = math.log %12 : vector<8x1xf32>
    %14 = vector.broadcast %13 : vector<8x1xf32> to vector<8x32xf32>
    %15 = arith.subf %9, %14 : vector<8x32xf32>
    %cst_6 = arith.constant dense<0xFF800000> : vector<8xf32>
    %16 = vector.multi_reduction <maximumf>, %5, %cst_6 [1] : vector<8x32xf32> to vector<8xf32>
    %17 = vector.shape_cast %16 : vector<8xf32> to vector<8x1xf32>
    %18 = vector.broadcast %17 : vector<8x1xf32> to vector<8x32xf32>
    %19 = arith.subf %5, %18 : vector<8x32xf32>
    %20 = math.exp %19 : vector<8x32xf32>
    %cst_7 = arith.constant dense<0.000000e+00> : vector<8xf32>
    %21 = vector.multi_reduction <add>, %20, %cst_7 [1] : vector<8x32xf32> to vector<8xf32>
    %22 = vector.shape_cast %21 : vector<8xf32> to vector<8x1xf32>
    %23 = tpu.reciprocal %22 : vector<8x1xf32> -> vector<8x1xf32>
    %24 = vector.broadcast %23 : vector<8x1xf32> to vector<8x32xf32>
    %25 = arith.mulf %20, %24 : vector<8x32xf32>
    %cst_8 = arith.constant 1.000000e-07 : f32
    %26 = vector.broadcast %cst_8 : f32 to vector<8x32xf32>
    %27 = arith.addf %25, %26 : vector<8x32xf32>
    %28 = math.log %27 : vector<8x32xf32>
    %29 = arith.subf %28, %15 : vector<8x32xf32>
    %30 = arith.mulf %27, %29 : vector<8x32xf32>
    %cst_9 = arith.constant dense<0.000000e+00> : vector<8xf32>
    %31 = vector.multi_reduction <add>, %30, %cst_9 [1] : vector<8x32xf32> to vector<8xf32>
    %32 = vector.shape_cast %31 : vector<8xf32> to vector<8x1xf32>
    %c8_i32 = arith.constant 8 : i32
    %33 = arith.muli %arg0, %c8_i32 : i32
    %34 = tpu.iota {dimensions = array<i32: 0>} : vector<8x1xi32>
    %35 = vector.broadcast %33 : i32 to vector<8x1xi32>
    %36 = arith.addi %35, %34 : vector<8x1xi32>
    %c8_i32_10 = arith.constant 8 : i32
    %37 = vector.broadcast %c8_i32_10 : i32 to vector<8x1xi32>
    %38 = arith.cmpi slt, %36, %37 : vector<8x1xi32>
    %cst_11 = arith.constant 0.000000e+00 : f32
    %39 = vector.broadcast %cst_11 : f32 to vector<8x1xf32>
    %40 = arith.select %38, %32, %39 : vector<8x1xi1>, vector<8x1xf32>
    %41 = vector.shape_cast %40 : vector<8x1xf32> to vector<1x8x1xf32>
    %cst_12 = arith.constant dense<0.000000e+00> : vector<1xf32>
    %42 = vector.multi_reduction <add>, %41, %cst_12 [1, 2] : vector<1x8x1xf32> to vector<1xf32>
    %43 = vector.shape_cast %42 : vector<1xf32> to vector<1x1x1xf32>
    %44 = vector.extract %43[0, 0, 0] : f32 from vector<1x1x1xf32>
    %45 = tpu.iota {dimensions = array<i32: 2>} : vector<1x1x128xi32>
    %c0_i32 = arith.constant 0 : i32
    %46 = vector.broadcast %c0_i32 : i32 to vector<1x1x128xi32>
    %47 = arith.cmpi eq, %45, %46 : vector<1x1x128xi32>
    %cst_13 = arith.constant 0.000000e+00 : f32
    %48 = vector.broadcast %44 : f32 to vector<1x1x128xf32>
    %49 = vector.broadcast %cst_13 : f32 to vector<1x1x128xf32>
    %50 = arith.select %47, %48, %49 : vector<1x1x128xi1>, vector<1x1x128xf32>
    %c0_14 = arith.constant 0 : index
    %c0_15 = arith.constant 0 : index
    %c0_16 = arith.constant 0 : index
    %51 = vector.load %arg3[%c0_14, %c0_15, %c0_16] : memref<1x1x128xf32, #tpu.memory_space<vmem>>, vector<1x1x128xf32>
    tpu.vector_store %arg3[%c0_14, %c0_15, %c0_16], %50 {strides = array<i32>} : memref<1x1x128xf32, #tpu.memory_space<vmem>>, vector<1x1x128xf32>,
    return
  }
  func.func @transform_0(%arg0: i32) -> (i32, i32) {
    %c0_i32 = arith.constant 0 : i32
    %c0_i32_0 = arith.constant 0 : i32
    return %arg0, %c0_i32 : i32, i32
  }
  func.func @transform_1(%arg0: i32) -> (i32, i32) {
    %c0_i32 = arith.constant 0 : i32
    %c0_i32_0 = arith.constant 0 : i32
    return %arg0, %c0_i32 : i32, i32
  }
  func.func @transform_2(%arg0: i32) -> (i32, i32, i32) {
    %c0_i32 = arith.constant 0 : i32
    %c0_i32_0 = arith.constant 0 : i32
    %c0_i32_1 = arith.constant 0 : i32
    return %arg0, %c0_i32, %c0_i32_0 : i32, i32, i32
  }
}

</mosaic_0001>

<llo_original>
// kernel: tpu_custom_call.1
$region0: #{tpu_custom_call.1}
  #allocation0 [shape = 'u32[]', space=smem, size = 0x4, offset = 0x4, fixed_abs, tag = 'smem constant byte address 0x4 - core index']
  #allocation1 [shape = 'u32[144,128]{1,0:T(1,128)}', space=vmem, size = 0x12000, scoped, tag = 'internal scratch']
  %s0 = inlined_call_operand.hbm [shape: f32[8,32], index: 0, kind: input, shape index: {}]
  %s1 = inlined_call_operand.hbm [shape: f32[8,32], index: 1, kind: input, shape index: {}]
  %s2 = inlined_call_operand.hbm [shape: f32[1,1,128], index: 2, kind: output, shape index: {}]
  %s3 = sld [smem:[#allocation0]]
  $region26: #{tpu_custom_call.1} parent=0
    _
  %s5 = ssub.s32 1, %s3
  %s6 = scalar_select 0, %s5, %s3
  $region1: #{tpu_custom_call.1} parent=0
    #allocation2 [shape = 'u8[4096]{0}', space=vmem, size = 0x1000, scoped, tag = 'input window, operand 0, single buffered']
    #allocation3 [shape = 's32[1]{0}', space=sflag, size = 0x4, scoped, tag = 'scoped memory for tpu_custom_call.1']
    #allocation4 [shape = 's32[1]{0}', space=sflag, size = 0x4, scoped, tag = 'scoped memory for tpu_custom_call.1']
    #allocation5 [shape = 'u8[4096]{0}', space=vmem, size = 0x1000, scoped, tag = 'input window, operand 1, single buffered']
    #allocation6 [shape = 's32[1]{0}', space=sflag, size = 0x4, scoped, tag = 'scoped memory for tpu_custom_call.1']
    #allocation7 [shape = 'u8[512]{0}', space=vmem, size = 0x400, scoped, tag = 'output window, operand 0, single buffered']
    %7 = vsyncpa [#allocation3], 0
    %8 = vsyncpa [#allocation6], 0
    %9 = vsyncpa [#allocation4], 0
    // Predicated region
    $region2: #{tpu_custom_call.1} parent=1 // pred_check
      _
    $region3: #{tpu_custom_call.1} parent=1 // pred_check_branch
      %11 = sbr.rel (0) target = $region5
    $region4: #{tpu_custom_call.1} parent=1 // pred_region
      %s13 = ssub.s32 128, 128
      %14 = vsyncadd [#allocation3], %s13
      %s16 = sshll.u32 [#allocation2], 4
      %s17 = int_to_ptr.vmem [resolvable:$true] %s16
      %19 = dma.hbm_to_vmem [thread:$0]  %s0, 128, %s17, [#allocation3]
    $region5: #{tpu_custom_call.1} parent=1 // pred_fallthru
      _
    // Predicated region
    $region6: #{tpu_custom_call.1} parent=1 // pred_check
      _
    $region7: #{tpu_custom_call.1} parent=1 // pred_check_branch
      %21 = sbr.rel (0) target = $region9
    $region8: #{tpu_custom_call.1} parent=1 // pred_region
      %s23 = ssub.s32 128, 128
      %24 = vsyncadd [#allocation6], %s23
      %s26 = sshll.u32 [#allocation5], 4
      %s27 = int_to_ptr.vmem [resolvable:$true] %s26
      %29 = dma.hbm_to_vmem [thread:$0]  %s1, 128, %s27, [#allocation6]
    $region9: #{tpu_custom_call.1} parent=1 // pred_fallthru
      _
    // Predicated region
    $region10: #{tpu_custom_call.1} parent=1 // pred_check
      _
    $region11: #{tpu_custom_call.1} parent=1 // pred_check_branch
      %31 = sbr.rel (0) target = $region13
    $region12: #{tpu_custom_call.1} parent=1 // pred_region
      %32 = dma.done [#allocation3], 128
    $region13: #{tpu_custom_call.1} parent=1 // pred_fallthru
      _
    // Predicated region
    $region14: #{tpu_custom_call.1} parent=1 // pred_check
      _
    $region15: #{tpu_custom_call.1} parent=1 // pred_check_branch
      %34 = sbr.rel (0) target = $region17
    $region16: #{tpu_custom_call.1} parent=1 // pred_region
      %35 = dma.done [#allocation6], 128
    $region17: #{tpu_custom_call.1} parent=1 // pred_fallthru
      _
    %v36 = vld [vmem:[#allocation2] sm:$0xff]
    %v37 = vmul.f32 %v36, 0.33333334
    %v38 = vld [vmem:[#allocation5] sm:$0xff]
    %v39 = vmul.f32 %v38, 0.33333334
    %vm40 = vcmask 261120
    %v41 = vsel %vm40, %v37, -inf
    %42 = vmax.xlane.f32.xlu0 %v41
    %v43 = vpop.xlane.xlu0 %42
    %v44 = vsub.f32 %v37, %v43
    %v45 = vmul.f32 %v44, 1.442695
    %v46 = vpow.pop %v45
    %v47 = vsel %vm40, %v46, 0.0
    %48 = vadd.xlane.f32.xlu0 %v47
    %v49 = vpop.xlane.xlu0 %48
    %v50 = vlog2.pop %v49
    %v51 = vmul.f32 %v50, 0.6931472
    %v52 = vsub.f32 %v44, %v51
    %v53 = vsel %vm40, %v39, -inf
    %54 = vmax.xlane.f32.xlu0 %v53
    %v55 = vpop.xlane.xlu0 %54
    %v56 = vsub.f32 %v39, %v55
    %v57 = vmul.f32 %v56, 1.442695
    %v58 = vpow.pop %v57
    %v59 = vsel %vm40, %v58, 0.0
    %60 = vadd.xlane.f32.xlu0 %v59
    %v61 = vpop.xlane.xlu0 %60
    %v62 = vrcp.pop %v61
    %v63 = vmul.f32 %v58, %v62
    %v64 = vadd.f32 %v63, 1e-07
    %v65 = vlog2.pop %v64
    %v66 = vmul.f32 %v65, 0.6931472
    %v67 = vsub.f32 %v66, %v52
    %v68 = vmul.f32 %v64, %v67
    %v69 = vsel %vm40, %v68, 0.0
    %70 = vadd.xlane.f32.xlu0 %v69
    %v71 = vpop.xlane.xlu0 %70
    %s72 = smul.u32 0, 8
    %v73 = vlaneseq
    %v74 = vshrl.u32 %v73, 7
    %v75 = vstv %s72
    %v76 = vadd.s32 %v75, %v74
    %vm77 = vcmp.lt.s32.totalorder %v76, 8
    %v78 = vsel %vm77, %v71, 0.0
    %vm79 = vcmask 7168
    %v80 = vsel %vm79, %v78, 0.0
    %81 = vadd.xlane.f32.xlu0 %v80
    %v82 = vpop.xlane.xlu0 %81
    %v83 = vrot.slane %v82, 4
    %v84 = vadd.f32 %v82, %v83
    %v85 = vrot.slane %v84, 2
    %v86 = vadd.f32 %v84, %v85
    %v87 = vrot.slane %v86, 1
    %v88 = vadd.f32 %v86, %v87
    %s89 = vtos %v88
    %v90 = vlaneseq
    %v91 = vand.u32 %v90, 127
    %vm92 = vcmp.eq.s32.totalorder %v91, 0
    %v93 = vstv %s89
    %v94 = vsel %vm92, %v93, 0.0
    %95 = vst [vmem:[#allocation7] sm:$0x1] %v94
    // Predicated region
    $region18: #{tpu_custom_call.1} parent=1 // pred_check
      _
    $region19: #{tpu_custom_call.1} parent=1 // pred_check_branch
      %97 = sbr.rel (0) target = $region21
    $region20: #{tpu_custom_call.1} parent=1 // pred_region
      %s99 = ssub.s32 16, 16
      %100 = vsyncadd [#allocation4], %s99
      %s102 = sshll.u32 [#allocation7], 4
      %s103 = int_to_ptr.vmem [resolvable:$true] %s102
      %105 = dma.vmem_to_hbm [thread:$0]  %s103, 16, %s2, [#allocation4]
    $region21: #{tpu_custom_call.1} parent=1 // pred_fallthru
      _
    // Predicated region
    $region22: #{tpu_custom_call.1} parent=1 // pred_check
      _
    $region23: #{tpu_custom_call.1} parent=1 // pred_check_branch
      %107 = sbr.rel (0) target = $region25
    $region24: #{tpu_custom_call.1} parent=1 // pred_region
      %108 = dma.done [#allocation4], 16
    $region25: #{tpu_custom_call.1} parent=1 // pred_fallthru
      _
    %109 = vsyncpa [#allocation3], 1
    %110 = vsyncpa [#allocation6], 1
    %111 = vsyncpa [#allocation4], 1

</llo_original>
